<compile_context>
chip_gen: v5e
topology: v5e:2x2
jax: 0.10.0
libtpu: 0.0.40
codegen_flags: <defaults>
</compile_context>

<pallas_src>
import functools
import math

import jax
import jax.numpy as jnp
from jax import lax
from jax.experimental import pallas as pl
from jax.experimental.pallas import tpu as pltpu


def _mha_kernel(q_ref, k_ref, v_ref, bias_ref,
                wq_ref, bq_ref, wo_ref, bo_ref,
                out_ref, ctx_scratch,
                *, head_count, dim_per_head, mxu_dtype):
    H = head_count
    dph = dim_per_head

    q_in = q_ref[0]                                  # (tq, D)  mxu_dtype
    k_all = k_ref[0]                                 # (Lk, D)  pre-projected, lane-dense
    v_all = v_ref[0]                                 # (Lk, D)  pre-projected, lane-dense
    bias = bias_ref[0].astype(jnp.float32)           # (tq, Lk) additive mask bias

    # Single D-wide Q projection (scale already folded into wq/bq by the wrapper).
    q_all = (jnp.dot(q_in, wq_ref[...], preferred_element_type=jnp.float32)
             + bq_ref[...]).astype(mxu_dtype)        # (tq, D)

    for h in range(H):
        lo = h * dph
        hi = lo + dph
        qh = q_all[:, lo:hi]                         # (tq, dph)
        kh = k_all[:, lo:hi]                         # (Lk, dph)
        vh = v_all[:, lo:hi]                         # (Lk, dph)

        # scores = qh @ kh^T : contract the last dims (no transpose materialized).
        scores = lax.dot_general(qh, kh, (((1,), (1,)), ((), ())),
                                 preferred_element_type=jnp.float32)   # (tq, Lk)
        scores = scores + bias

        # Softmax along keys: f32 statistics, exact normalization.
        s_max = jnp.max(scores, axis=-1, keepdims=True)
        p = jnp.exp(scores - s_max)
        attn = (p / jnp.sum(p, axis=-1, keepdims=True)).astype(mxu_dtype)

        # dropout(attn) is identity at inference.
        ctx_h = jnp.dot(attn, vh, preferred_element_type=jnp.float32)  # (tq, dph)

        # torch `unshape`: head h occupies columns [h*dph, (h+1)*dph) of ctx.
        ctx_scratch[:, lo:hi] = ctx_h.astype(ctx_scratch.dtype)

    # Single D-wide final linear.
    out = (jnp.dot(ctx_scratch[...], wo_ref[...],
                   preferred_element_type=jnp.float32) + bo_ref[...])   # (tq, D)
    out_ref[0] = out.astype(out_ref.dtype)


def multi_headed_attention(key, value, query, mask, params, head_count,
                           *, mxu_dtype=jnp.bfloat16, q_block=128,
                           out_dtype=jnp.float32):
    B, Lq, D = query.shape
    Lk = key.shape[1]
    H = head_count
    assert D % H == 0
    dph = D // H
    scale = 1.0 / math.sqrt(dph)

    # ---- Hoisted K/V projections (single D-wide matmuls), lane-dense (B, Lk, D).
    k_proj = (jnp.einsum("bld,od->blo", key, params["wk"]) + params["bk"]).astype(mxu_dtype)
    v_proj = (jnp.einsum("bld,od->blo", value, params["wv"]) + params["bv"]).astype(mxu_dtype)
    q_cast = query.astype(mxu_dtype)

    # Mask -> additive bias once in the wrapper (bf16): 1 == masked -> -1e18.
    mask_bias = jnp.where(mask != 0, -1e18, 0.0).astype(jnp.bfloat16)   # (B, Lq, Lk)

    # Q-tile selection: pad Lq up to a multiple of the tile (never one giant tile).
    if Lq <= q_block:
        tq = Lq
        lq_pad = Lq
    else:
        tq = q_block
        lq_pad = -(-Lq // tq) * tq
    pad = lq_pad - Lq
    if pad:
        q_cast = jnp.pad(q_cast, ((0, 0), (0, pad), (0, 0)))
        mask_bias = jnp.pad(mask_bias, ((0, 0), (0, pad), (0, 0)))
    nq = lq_pad // tq

    # Weights kept lane-dense (D, D); scale folded into the Q projection.
    wq_r = (params["wq"].T * scale).astype(mxu_dtype)    # x @ wq_r == linear_query(x) * scale
    bq_r = (params["bq"] * scale).astype(jnp.float32)    # (1, D)
    wo_r = params["wo"].T.astype(mxu_dtype)              # (D, D)
    bo_r = params["bo"].astype(jnp.float32)              # (1, D)

    kern = functools.partial(_mha_kernel, head_count=H, dim_per_head=dph,
                             mxu_dtype=mxu_dtype)

    q_spec = pl.BlockSpec((1, tq, D), lambda b, qi: (b, qi, 0))
    kv_spec = pl.BlockSpec((1, Lk, D), lambda b, qi: (b, 0, 0))
    bias_spec = pl.BlockSpec((1, tq, Lk), lambda b, qi: (b, qi, 0))
    out_spec = pl.BlockSpec((1, tq, D), lambda b, qi: (b, qi, 0))

    def const_spec(shape):
        return pl.BlockSpec(shape, lambda b, qi: (0,) * len(shape))

    in_specs = [
        q_spec, kv_spec, kv_spec, bias_spec,
        const_spec((D, D)), const_spec((1, D)),   # Wq (scaled), bq (scaled)
        const_spec((D, D)), const_spec((1, D)),   # Wo, bo
    ]

    # VMEM budget: double-buffered blocks + scratch + live f32 temporaries,
    # capped against the actual generation's VMEM capacity.
    isz = jnp.dtype(mxu_dtype).itemsize
    osz = jnp.dtype(out_dtype).itemsize
    est = (2 * tq * D * isz                       # q blocks
           + 2 * 2 * Lk * D * isz                 # k, v blocks
           + 2 * tq * Lk * 2                      # bias blocks (bf16)
           + 2 * 2 * D * D * isz + 2 * 2 * D * 4  # weights + biases
           + 2 * tq * D * osz                     # out blocks
           + tq * D * isz                         # ctx scratch
           + 4 * tq * Lk * 4 + 3 * tq * D * 4)    # scores/probs/q_all temporaries
    try:
        vmem_cap = int(pltpu.get_tpu_info().vmem_capacity_bytes)
    except Exception:
        vmem_cap = 64 << 20                       # conservative: v7x per-TC VMEM
    vmem_limit = int(min(max(2 * est, 8 << 20), int(0.7 * vmem_cap)))

    out = pl.pallas_call(
        kern,
        out_shape=jax.ShapeDtypeStruct((B, lq_pad, D), out_dtype),
        grid_spec=pltpu.PrefetchScalarGridSpec(
            num_scalar_prefetch=0,
            grid=(B, nq),
            in_specs=in_specs,
            out_specs=out_spec,
            scratch_shapes=[pltpu.VMEM((tq, D), mxu_dtype)],   # per-tile context
        ),
        compiler_params=pltpu.CompilerParams(
            dimension_semantics=("parallel", "parallel"),
            vmem_limit_bytes=vmem_limit,
        ),
    )(q_cast, k_proj, v_proj, mask_bias, wq_r, bq_r, wo_r, bo_r)

    return out[:, :Lq, :] if pad else out


def mha_reference(key, value, query, mask, params, head_count):
    """Pure-JAX f32 reference matching the PyTorch forward (eval mode)."""
    B, Lq, D = query.shape
    Lk = key.shape[1]
    dph = D // head_count

    def lin(x, w, b):
        return jnp.einsum("bld,od->blo", x, w) + b[0]

    def shape(x, L):
        return x.reshape(B, L, head_count, dph).transpose(0, 2, 1, 3)

    K = shape(lin(key, params["wk"], params["bk"]), Lk)
    V = shape(lin(value, params["wv"], params["bv"]), Lk)
    Q = shape(lin(query, params["wq"], params["bq"]), Lq) / math.sqrt(dph)

    scores = jnp.einsum("bhqd,bhkd->bhqk", Q, K)
    scores = jnp.where(mask[:, None, :, :] != 0, -1e18, scores)
    attn = jax.nn.softmax(scores, axis=-1)
    ctx = jnp.einsum("bhqk,bhkd->bhqd", attn, V)
    ctx = ctx.transpose(0, 2, 1, 3).reshape(B, Lq, D)
    return lin(ctx, params["wo"], params["bo"])


if __name__ == "__main__":
    # Small shapes: batch=2, seq=8, model_dim=32, heads=4 (dim_per_head=8).
    B, L, D, H = 2, 8, 32, 4

    root = jax.random.PRNGKey(0)
    keys = jax.random.split(root, 16)

    def init_linear(kw, kb, out_dim, in_dim):
        bound = 1.0 / math.sqrt(in_dim)
        w = jax.random.uniform(kw, (out_dim, in_dim), jnp.float32, -bound, bound)
        b = jax.random.uniform(kb, (1, out_dim), jnp.float32, -bound, bound)
        return w, b

    wk, bk = init_linear(keys[0], keys[1], D, D)
    wv, bv = init_linear(keys[2], keys[3], D, D)
    wq, bq = init_linear(keys[4], keys[5], D, D)
    wo, bo = init_linear(keys[6], keys[7], D, D)
    params = dict(wk=wk, bk=bk, wv=wv, bv=bv, wq=wq, bq=bq, wo=wo, bo=bo)

    key_in = jax.random.normal(keys[8], (B, L, D), jnp.float32)
    value_in = jax.random.normal(keys[9], (B, L, D), jnp.float32)
    query_in = jax.random.normal(keys[10], (B, L, D), jnp.float32)
    # mask: 1 == masked position (matches torch masked_fill semantics);
    # mask out the last two key positions for every query.
    mask = jnp.zeros((B, L, L), jnp.int32).at[:, :, -2:].set(1)

    out = multi_headed_attention(key_in, value_in, query_in, mask, params, H)
    out = jax.block_until_ready(out)

    ref = mha_reference(key_in, value_in, query_in, mask, params, H)
    assert out.shape == (B, L, D)
    # Tolerance accounts for bf16 MXU operands; genuine bugs produce errors of
    # the same order as the outputs (~0.5), far above this.
    err = float(jnp.max(jnp.abs(out - ref)))
    assert jnp.allclose(out, ref, atol=5e-2, rtol=5e-2), f"mismatch vs reference (max err {err})"

    print("KERNEL_OK")
</pallas_src>

<mosaic_0001>
module attributes {stable_mosaic.version = 11 : i64} {
  func.func @_mha_kernel(%arg0: i32, %arg1: i32, %arg2: memref<1x8x32xbf16, #tpu.memory_space<vmem>>, %arg3: memref<1x8x32xbf16, #tpu.memory_space<vmem>>, %arg4: memref<1x8x32xbf16, #tpu.memory_space<vmem>>, %arg5: memref<1x8x8xbf16, #tpu.memory_space<vmem>>, %arg6: memref<32x32xbf16, #tpu.memory_space<vmem>>, %arg7: memref<1x32xf32, #tpu.memory_space<vmem>>, %arg8: memref<32x32xbf16, #tpu.memory_space<vmem>>, %arg9: memref<1x32xf32, #tpu.memory_space<vmem>>, %arg10: memref<1x8x32xf32, #tpu.memory_space<vmem>>, %arg11: memref<8x32xbf16, #tpu.memory_space<vmem>>) attributes {dimension_semantics = [#tpu.dimension_semantics<parallel>, #tpu.dimension_semantics<parallel>], iteration_bounds = array<i64: 2, 1>, scalar_prefetch = 0 : i64, scratch_operands = 1 : i64, tpu.core_type = #tpu.core_type<tc>, window_params = [{transform_indices = @transform_0, window_bounds = array<i64: 1, 8, 32>}, {transform_indices = @transform_1, window_bounds = array<i64: 1, 8, 32>}, {transform_indices = @transform_2, window_bounds = array<i64: 1, 8, 32>}, {transform_indices = @transform_3, window_bounds = array<i64: 1, 8, 8>}, {pipeline_mode = #tpu.pipeline_mode<synchronous>, transform_indices = @transform_4, window_bounds = array<i64: 32, 32>}, {pipeline_mode = #tpu.pipeline_mode<synchronous>, transform_indices = @transform_5, window_bounds = array<i64: 1, 32>}, {pipeline_mode = #tpu.pipeline_mode<synchronous>, transform_indices = @transform_6, window_bounds = array<i64: 32, 32>}, {pipeline_mode = #tpu.pipeline_mode<synchronous>, transform_indices = @transform_7, window_bounds = array<i64: 1, 32>}, {transform_indices = @transform_8, window_bounds = array<i64: 1, 8, 32>}]} {
    %c0 = arith.constant 0 : index
    %c0_0 = arith.constant 0 : index
    %c0_1 = arith.constant 0 : index
    %0 = vector.load %arg2[%c0, %c0_0, %c0_1] : memref<1x8x32xbf16, #tpu.memory_space<vmem>>, vector<1x8x32xbf16>
    %1 = vector.shape_cast %0 : vector<1x8x32xbf16> to vector<8x32xbf16>
    %c0_2 = arith.constant 0 : index
    %c0_3 = arith.constant 0 : index
    %c0_4 = arith.constant 0 : index
    %2 = vector.load %arg3[%c0_2, %c0_3, %c0_4] : memref<1x8x32xbf16, #tpu.memory_space<vmem>>, vector<1x8x32xbf16>
    %3 = vector.shape_cast %2 : vector<1x8x32xbf16> to vector<8x32xbf16>
    %c0_5 = arith.constant 0 : index
    %c0_6 = arith.constant 0 : index
    %c0_7 = arith.constant 0 : index
    %4 = vector.load %arg4[%c0_5, %c0_6, %c0_7] : memref<1x8x32xbf16, #tpu.memory_space<vmem>>, vector<1x8x32xbf16>
    %5 = vector.shape_cast %4 : vector<1x8x32xbf16> to vector<8x32xbf16>
    %c0_8 = arith.constant 0 : index
    %c0_9 = arith.constant 0 : index
    %c0_10 = arith.constant 0 : index
    %6 = vector.load %arg5[%c0_8, %c0_9, %c0_10] : memref<1x8x8xbf16, #tpu.memory_space<vmem>>, vector<1x8x8xbf16>
    %7 = vector.shape_cast %6 : vector<1x8x8xbf16> to vector<8x8xbf16>
    %8 = arith.extf %7 : vector<8x8xbf16> to vector<8x8xf32>
    %c0_11 = arith.constant 0 : index
    %c0_12 = arith.constant 0 : index
    %9 = vector.load %arg6[%c0_11, %c0_12] : memref<32x32xbf16, #tpu.memory_space<vmem>>, vector<32x32xbf16>
    %cst = arith.constant dense<0.000000e+00> : vector<8x32xf32>
    %10 = tpu.matmul %1, %9, %cst {dimension_numbers = #tpu.dot_dimension_numbers<[1], [0], [0], [1], [0, 0, 1, 1], [], []>} : vector<8x32xbf16>, vector<32x32xbf16>, vector<8x32xf32> -> vector<8x32xf32>
    %c0_13 = arith.constant 0 : index
    %c0_14 = arith.constant 0 : index
    %11 = vector.load %arg7[%c0_13, %c0_14] : memref<1x32xf32, #tpu.memory_space<vmem>>, vector<1x32xf32>
    %12 = vector.broadcast %11 : vector<1x32xf32> to vector<8x32xf32>
    %13 = arith.addf %10, %12 : vector<8x32xf32>
    %14 = arith.truncf %13 : vector<8x32xf32> to vector<8x32xbf16>
    %15 = vector.extract_strided_slice %14 {offsets = [0, 0], sizes = [8, 8], strides = [1, 1]} : vector<8x32xbf16> to vector<8x8xbf16>
    %16 = vector.extract_strided_slice %3 {offsets = [0, 0], sizes = [8, 8], strides = [1, 1]} : vector<8x32xbf16> to vector<8x8xbf16>
    %17 = vector.extract_strided_slice %5 {offsets = [0, 0], sizes = [8, 8], strides = [1, 1]} : vector<8x32xbf16> to vector<8x8xbf16>
    %cst_15 = arith.constant dense<0.000000e+00> : vector<8x8xf32>
    %18 = tpu.matmul %15, %16, %cst_15 {dimension_numbers = #tpu.dot_dimension_numbers<[1], [1], [0], [0], [0, 0, 1, 0], [], []>} : vector<8x8xbf16>, vector<8x8xbf16>, vector<8x8xf32> -> vector<8x8xf32>
    %19 = arith.addf %18, %8 : vector<8x8xf32>
    %cst_16 = arith.constant dense<0xFF800000> : vector<8xf32>
    %20 = vector.multi_reduction <maximumf>, %19, %cst_16 [1] : vector<8x8xf32> to vector<8xf32>
    %21 = vector.shape_cast %20 : vector<8xf32> to vector<8x1xf32>
    %22 = vector.broadcast %21 : vector<8x1xf32> to vector<8x8xf32>
    %23 = arith.subf %19, %22 : vector<8x8xf32>
    %24 = math.exp %23 : vector<8x8xf32>
    %cst_17 = arith.constant dense<0.000000e+00> : vector<8xf32>
    %25 = vector.multi_reduction <add>, %24, %cst_17 [1] : vector<8x8xf32> to vector<8xf32>
    %26 = vector.shape_cast %25 : vector<8xf32> to vector<8x1xf32>
    %27 = vector.broadcast %26 : vector<8x1xf32> to vector<8x8xf32>
    %28 = arith.divf %24, %27 : vector<8x8xf32>
    %29 = arith.truncf %28 : vector<8x8xf32> to vector<8x8xbf16>
    %cst_18 = arith.constant dense<0.000000e+00> : vector<8x8xf32>
    %30 = tpu.matmul %29, %17, %cst_18 {dimension_numbers = #tpu.dot_dimension_numbers<[1], [0], [0], [1], [0, 0, 1, 1], [], []>} : vector<8x8xbf16>, vector<8x8xbf16>, vector<8x8xf32> -> vector<8x8xf32>
    %31 = arith.truncf %30 : vector<8x8xf32> to vector<8x8xbf16>
    %c0_19 = arith.constant 0 : index
    %c0_20 = arith.constant 0 : index
    %32 = vector.load %arg11[%c0_19, %c0_20] : memref<8x32xbf16, #tpu.memory_space<vmem>>, vector<8x8xbf16>
    tpu.vector_store %arg11[%c0_19, %c0_20], %31 {strides = array<i32>} : memref<8x32xbf16, #tpu.memory_space<vmem>>, vector<8x8xbf16>,
    %33 = vector.extract_strided_slice %14 {offsets = [0, 8], sizes = [8, 8], strides = [1, 1]} : vector<8x32xbf16> to vector<8x8xbf16>
    %34 = vector.extract_strided_slice %3 {offsets = [0, 8], sizes = [8, 8], strides = [1, 1]} : vector<8x32xbf16> to vector<8x8xbf16>
    %35 = vector.extract_strided_slice %5 {offsets = [0, 8], sizes = [8, 8], strides = [1, 1]} : vector<8x32xbf16> to vector<8x8xbf16>
    %cst_21 = arith.constant dense<0.000000e+00> : vector<8x8xf32>
    %36 = tpu.matmul %33, %34, %cst_21 {dimension_numbers = #tpu.dot_dimension_numbers<[1], [1], [0], [0], [0, 0, 1, 0], [], []>} : vector<8x8xbf16>, vector<8x8xbf16>, vector<8x8xf32> -> vector<8x8xf32>
    %37 = arith.addf %36, %8 : vector<8x8xf32>
    %cst_22 = arith.constant dense<0xFF800000> : vector<8xf32>
    %38 = vector.multi_reduction <maximumf>, %37, %cst_22 [1] : vector<8x8xf32> to vector<8xf32>
    %39 = vector.shape_cast %38 : vector<8xf32> to vector<8x1xf32>
    %40 = vector.broadcast %39 : vector<8x1xf32> to vector<8x8xf32>
    %41 = arith.subf %37, %40 : vector<8x8xf32>
    %42 = math.exp %41 : vector<8x8xf32>
    %cst_23 = arith.constant dense<0.000000e+00> : vector<8xf32>
    %43 = vector.multi_reduction <add>, %42, %cst_23 [1] : vector<8x8xf32> to vector<8xf32>
    %44 = vector.shape_cast %43 : vector<8xf32> to vector<8x1xf32>
    %45 = vector.broadcast %44 : vector<8x1xf32> to vector<8x8xf32>
    %46 = arith.divf %42, %45 : vector<8x8xf32>
    %47 = arith.truncf %46 : vector<8x8xf32> to vector<8x8xbf16>
    %cst_24 = arith.constant dense<0.000000e+00> : vector<8x8xf32>
    %48 = tpu.matmul %47, %35, %cst_24 {dimension_numbers = #tpu.dot_dimension_numbers<[1], [0], [0], [1], [0, 0, 1, 1], [], []>} : vector<8x8xbf16>, vector<8x8xbf16>, vector<8x8xf32> -> vector<8x8xf32>
    %49 = arith.truncf %48 : vector<8x8xf32> to vector<8x8xbf16>
    %c0_25 = arith.constant 0 : index
    %c8 = arith.constant 8 : index
    %50 = vector.load %arg11[%c0_25, %c8] : memref<8x32xbf16, #tpu.memory_space<vmem>>, vector<8x8xbf16>
    tpu.vector_store %arg11[%c0_25, %c8], %49 {strides = array<i32>} : memref<8x32xbf16, #tpu.memory_space<vmem>>, vector<8x8xbf16>,
    %51 = vector.extract_strided_slice %14 {offsets = [0, 16], sizes = [8, 8], strides = [1, 1]} : vector<8x32xbf16> to vector<8x8xbf16>
    %52 = vector.extract_strided_slice %3 {offsets = [0, 16], sizes = [8, 8], strides = [1, 1]} : vector<8x32xbf16> to vector<8x8xbf16>
    %53 = vector.extract_strided_slice %5 {offsets = [0, 16], sizes = [8, 8], strides = [1, 1]} : vector<8x32xbf16> to vector<8x8xbf16>
    %cst_26 = arith.constant dense<0.000000e+00> : vector<8x8xf32>
    %54 = tpu.matmul %51, %52, %cst_26 {dimension_numbers = #tpu.dot_dimension_numbers<[1], [1], [0], [0], [0, 0, 1, 0], [], []>} : vector<8x8xbf16>, vector<8x8xbf16>, vector<8x8xf32> -> vector<8x8xf32>
    %55 = arith.addf %54, %8 : vector<8x8xf32>
    %cst_27 = arith.constant dense<0xFF800000> : vector<8xf32>
    %56 = vector.multi_reduction <maximumf>, %55, %cst_27 [1] : vector<8x8xf32> to vector<8xf32>
    %57 = vector.shape_cast %56 : vector<8xf32> to vector<8x1xf32>
    %58 = vector.broadcast %57 : vector<8x1xf32> to vector<8x8xf32>
    %59 = arith.subf %55, %58 : vector<8x8xf32>
    %60 = math.exp %59 : vector<8x8xf32>
    %cst_28 = arith.constant dense<0.000000e+00> : vector<8xf32>
    %61 = vector.multi_reduction <add>, %60, %cst_28 [1] : vector<8x8xf32> to vector<8xf32>
    %62 = vector.shape_cast %61 : vector<8xf32> to vector<8x1xf32>
    %63 = vector.broadcast %62 : vector<8x1xf32> to vector<8x8xf32>
    %64 = arith.divf %60, %63 : vector<8x8xf32>
    %65 = arith.truncf %64 : vector<8x8xf32> to vector<8x8xbf16>
    %cst_29 = arith.constant dense<0.000000e+00> : vector<8x8xf32>
    %66 = tpu.matmul %65, %53, %cst_29 {dimension_numbers = #tpu.dot_dimension_numbers<[1], [0], [0], [1], [0, 0, 1, 1], [], []>} : vector<8x8xbf16>, vector<8x8xbf16>, vector<8x8xf32> -> vector<8x8xf32>
    %67 = arith.truncf %66 : vector<8x8xf32> to vector<8x8xbf16>
    %c0_30 = arith.constant 0 : index
    %c16 = arith.constant 16 : index
    %68 = vector.load %arg11[%c0_30, %c16] : memref<8x32xbf16, #tpu.memory_space<vmem>>, vector<8x8xbf16>
    tpu.vector_store %arg11[%c0_30, %c16], %67 {strides = array<i32>} : memref<8x32xbf16, #tpu.memory_space<vmem>>, vector<8x8xbf16>,
    %69 = vector.extract_strided_slice %14 {offsets = [0, 24], sizes = [8, 8], strides = [1, 1]} : vector<8x32xbf16> to vector<8x8xbf16>
    %70 = vector.extract_strided_slice %3 {offsets = [0, 24], sizes = [8, 8], strides = [1, 1]} : vector<8x32xbf16> to vector<8x8xbf16>
    %71 = vector.extract_strided_slice %5 {offsets = [0, 24], sizes = [8, 8], strides = [1, 1]} : vector<8x32xbf16> to vector<8x8xbf16>
    %cst_31 = arith.constant dense<0.000000e+00> : vector<8x8xf32>
    %72 = tpu.matmul %69, %70, %cst_31 {dimension_numbers = #tpu.dot_dimension_numbers<[1], [1], [0], [0], [0, 0, 1, 0], [], []>} : vector<8x8xbf16>, vector<8x8xbf16>, vector<8x8xf32> -> vector<8x8xf32>
    %73 = arith.addf %72, %8 : vector<8x8xf32>
    %cst_32 = arith.constant dense<0xFF800000> : vector<8xf32>
    %74 = vector.multi_reduction <maximumf>, %73, %cst_32 [1] : vector<8x8xf32> to vector<8xf32>
    %75 = vector.shape_cast %74 : vector<8xf32> to vector<8x1xf32>
    %76 = vector.broadcast %75 : vector<8x1xf32> to vector<8x8xf32>
    %77 = arith.subf %73, %76 : vector<8x8xf32>
    %78 = math.exp %77 : vector<8x8xf32>
    %cst_33 = arith.constant dense<0.000000e+00> : vector<8xf32>
    %79 = vector.multi_reduction <add>, %78, %cst_33 [1] : vector<8x8xf32> to vector<8xf32>
    %80 = vector.shape_cast %79 : vector<8xf32> to vector<8x1xf32>
    %81 = vector.broadcast %80 : vector<8x1xf32> to vector<8x8xf32>
    %82 = arith.divf %78, %81 : vector<8x8xf32>
    %83 = arith.truncf %82 : vector<8x8xf32> to vector<8x8xbf16>
    %cst_34 = arith.constant dense<0.000000e+00> : vector<8x8xf32>
    %84 = tpu.matmul %83, %71, %cst_34 {dimension_numbers = #tpu.dot_dimension_numbers<[1], [0], [0], [1], [0, 0, 1, 1], [], []>} : vector<8x8xbf16>, vector<8x8xbf16>, vector<8x8xf32> -> vector<8x8xf32>
    %85 = arith.truncf %84 : vector<8x8xf32> to vector<8x8xbf16>
    %c0_35 = arith.constant 0 : index
    %c24 = arith.constant 24 : index
    %86 = vector.load %arg11[%c0_35, %c24] : memref<8x32xbf16, #tpu.memory_space<vmem>>, vector<8x8xbf16>
    tpu.vector_store %arg11[%c0_35, %c24], %85 {strides = array<i32>} : memref<8x32xbf16, #tpu.memory_space<vmem>>, vector<8x8xbf16>,
    %c0_36 = arith.constant 0 : index
    %c0_37 = arith.constant 0 : index
    %87 = vector.load %arg11[%c0_36, %c0_37] : memref<8x32xbf16, #tpu.memory_space<vmem>>, vector<8x32xbf16>
    %c0_38 = arith.constant 0 : index
    %c0_39 = arith.constant 0 : index
    %88 = vector.load %arg8[%c0_38, %c0_39] : memref<32x32xbf16, #tpu.memory_space<vmem>>, vector<32x32xbf16>
    %cst_40 = arith.constant dense<0.000000e+00> : vector<8x32xf32>
    %89 = tpu.matmul %87, %88, %cst_40 {dimension_numbers = #tpu.dot_dimension_numbers<[1], [0], [0], [1], [0, 0, 1, 1], [], []>} : vector<8x32xbf16>, vector<32x32xbf16>, vector<8x32xf32> -> vector<8x32xf32>
    %c0_41 = arith.constant 0 : index
    %c0_42 = arith.constant 0 : index
    %90 = vector.load %arg9[%c0_41, %c0_42] : memref<1x32xf32, #tpu.memory_space<vmem>>, vector<1x32xf32>
    %91 = vector.broadcast %90 : vector<1x32xf32> to vector<8x32xf32>
    %92 = arith.addf %89, %91 : vector<8x32xf32>
    %c0_43 = arith.constant 0 : index
    %c0_44 = arith.constant 0 : index
    %c0_45 = arith.constant 0 : index
    %93 = vector.load %arg10[%c0_43, %c0_44, %c0_45] : memref<1x8x32xf32, #tpu.memory_space<vmem>>, vector<1x8x32xf32>
    %94 = vector.shape_cast %93 : vector<1x8x32xf32> to vector<8x32xf32>
    %95 = vector.shape_cast %92 : vector<8x32xf32> to vector<1x8x32xf32>
    tpu.vector_store %arg10[%c0_43, %c0_44, %c0_45], %95 {strides = array<i32>} : memref<1x8x32xf32, #tpu.memory_space<vmem>>, vector<1x8x32xf32>,
    return
  }
  func.func @transform_0(%arg0: i32, %arg1: i32) -> (i32, i32, i32) {
    %c0_i32 = arith.constant 0 : i32
    %c0_i32_0 = arith.constant 0 : i32
    return %arg0, %arg1, %c0_i32 : i32, i32, i32
  }
  func.func @transform_1(%arg0: i32, %arg1: i32) -> (i32, i32, i32) {
    %c0_i32 = arith.constant 0 : i32
    %c0_i32_0 = arith.constant 0 : i32
    %c0_i32_1 = arith.constant 0 : i32
    return %arg0, %c0_i32, %c0_i32_0 : i32, i32, i32
  }
  func.func @transform_2(%arg0: i32, %arg1: i32) -> (i32, i32, i32) {
    %c0_i32 = arith.constant 0 : i32
    %c0_i32_0 = arith.constant 0 : i32
    %c0_i32_1 = arith.constant 0 : i32
    return %arg0, %c0_i32, %c0_i32_0 : i32, i32, i32
  }
  func.func @transform_3(%arg0: i32, %arg1: i32) -> (i32, i32, i32) {
    %c0_i32 = arith.constant 0 : i32
    %c0_i32_0 = arith.constant 0 : i32
    return %arg0, %arg1, %c0_i32 : i32, i32, i32
  }
  func.func @transform_4(%arg0: i32, %arg1: i32) -> (i32, i32) {
    %c0_i32 = arith.constant 0 : i32
    %c0_i32_0 = arith.constant 0 : i32
    %c0_i32_1 = arith.constant 0 : i32
    return %c0_i32, %c0_i32_0 : i32, i32
  }
  func.func @transform_5(%arg0: i32, %arg1: i32) -> (i32, i32) {
    %c0_i32 = arith.constant 0 : i32
    %c0_i32_0 = arith.constant 0 : i32
    %c0_i32_1 = arith.constant 0 : i32
    return %c0_i32, %c0_i32_0 : i32, i32
  }
  func.func @transform_6(%arg0: i32, %arg1: i32) -> (i32, i32) {
    %c0_i32 = arith.constant 0 : i32
    %c0_i32_0 = arith.constant 0 : i32
    %c0_i32_1 = arith.constant 0 : i32
    return %c0_i32, %c0_i32_0 : i32, i32
  }
  func.func @transform_7(%arg0: i32, %arg1: i32) -> (i32, i32) {
    %c0_i32 = arith.constant 0 : i32
    %c0_i32_0 = arith.constant 0 : i32
    %c0_i32_1 = arith.constant 0 : i32
    return %c0_i32, %c0_i32_0 : i32, i32
  }
  func.func @transform_8(%arg0: i32, %arg1: i32) -> (i32, i32, i32) {
    %c0_i32 = arith.constant 0 : i32
    %c0_i32_0 = arith.constant 0 : i32
    return %arg0, %arg1, %c0_i32 : i32, i32, i32
  }
}

</mosaic_0001>

<llo_original>
// kernel: tpu_custom_call.1
$region0: #{tpu_custom_call.1}
  #allocation0 [shape = 'u32[]', space=smem, size = 0x4, offset = 0x4, fixed_abs, tag = 'smem constant byte address 0x4 - core index']
  #allocation1 [shape = 'u32[72,128]{1,0:T(1,128)}', space=vmem, size = 0x9000, scoped, tag = 'internal scratch']
  #allocation2 [shape = 'bf16[8,32]{1,0:T(8,128)(2,1)}', space=vmem, size = 0x800, scoped, tag = 'scratch operand']
  %s0 = inlined_call_operand.hbm [shape: bf16[2,8,32], index: 0, kind: input, shape index: {}]
  %s1 = inlined_call_operand.hbm [shape: bf16[2,8,32], index: 1, kind: input, shape index: {}]
  %s2 = inlined_call_operand.hbm [shape: bf16[2,8,32], index: 2, kind: input, shape index: {}]
  %s3 = inlined_call_operand.hbm [shape: bf16[2,8,8], index: 3, kind: input, shape index: {}]
  %s4 = inlined_call_operand.hbm [shape: bf16[32,32], index: 4, kind: input, shape index: {}]
  %s5 = inlined_call_operand.vmem [shape: f32[1,32], index: 5, kind: input, shape index: {}]
  %s6 = inlined_call_operand.hbm [shape: bf16[32,32], index: 6, kind: input, shape index: {}]
  %s7 = inlined_call_operand.vmem [shape: f32[1,32], index: 7, kind: input, shape index: {}]
  %s8 = inlined_call_operand.hbm [shape: f32[2,8,32], index: 8, kind: output, shape index: {}]
  %s9 = sld [smem:[#allocation0]]
  $region89: #{tpu_custom_call.1} parent=0
    _
  %s11 = ssub.s32 1, %s9
  %s12 = scalar_select 0, %s11, %s9
  $region1: #{tpu_custom_call.1} parent=0
    #allocation3 [shape = 'u8[4096]{0}', space=vmem, size = 0x1000, scoped, tag = 'input window, operand 0']
    #allocation4 [shape = 's32[2]{0}', space=sflag, size = 0x8, scoped, tag = 'scoped memory for tpu_custom_call.1']
    #allocation5 [shape = 's32[2]{0}', space=sflag, size = 0x8, scoped, tag = 'scoped memory for tpu_custom_call.1']
    #allocation6 [shape = 'u8[4096]{0}', space=vmem, size = 0x1000, scoped, tag = 'input window, operand 1']
    #allocation7 [shape = 's32[2]{0}', space=sflag, size = 0x8, scoped, tag = 'scoped memory for tpu_custom_call.1']
    #allocation8 [shape = 'u8[4096]{0}', space=vmem, size = 0x1000, scoped, tag = 'input window, operand 2']
    #allocation9 [shape = 'u8[4096]{0}', space=vmem, size = 0x1000, scoped, tag = 'input window, operand 3']
    #allocation10 [shape = 's32[2]{0}', space=sflag, size = 0x8, scoped, tag = 'scoped memory for tpu_custom_call.1']
    #allocation11 [shape = 'u8[8192]{0}', space=vmem, size = 0x2000, scoped, tag = 'input window, operand 4, single buffered']
    #allocation12 [shape = 'u8[8192]{0}', space=vmem, size = 0x2000, scoped, tag = 'input window, operand 6, single buffered']
    #allocation13 [shape = 's32[1]{0}', space=sflag, size = 0x4, scoped, tag = 'scoped memory for tpu_custom_call.1']
    #allocation14 [shape = 'u8[8192]{0}', space=vmem, size = 0x2000, scoped, tag = 'output window, operand 0']
    %13 = vsyncpa [#allocation4], 0
    %s14 = scalar_lea.sflag [#allocation4], 1
    %15 = vsyncpa %s14, 0
    %16 = vsyncpa [#allocation7], 0
    %s17 = scalar_lea.sflag [#allocation7], 1
    %18 = vsyncpa %s17, 0
    %19 = vsyncpa [#allocation10], 0
    %s20 = scalar_lea.sflag [#allocation10], 1
    %21 = vsyncpa %s20, 0
    %22 = vsyncpa [#allocation13], 0
    %23 = vsyncpa [#allocation5], 0
    %s24 = scalar_lea.sflag [#allocation5], 1
    %25 = vsyncpa %s24, 0
    loop: start=0, step=1, limit=4
    $region2: #{tpu_custom_call.1} parent=1 // loop_pre_header
      _
    $region3: #{tpu_custom_call.1} parent=1 // loop_header
      %s27 = sphi 0, %s31
      %p28 = scmp.ge.s32.totalorder %s27, 4
      %s34 = sphi 0, %s46
      %s35 = sphi 0, %s42
      %s36 = sphi 0, %s34
      %s37 = sphi 0, %s35
      %s38 = sphi 0, %s36
      %s39 = sphi 0, %s37
      %s51 = sphi 0, %s53
      %s54 = sphi 0, %s51
      %s55 = sphi 0, %s54
      %s71 = sphi 0, %s55
      %s77 = sphi 0, %s79
      %s80 = sphi 0, %s77
      %s81 = sphi 0, %s80
      %s97 = sphi 0, %s81
      %s103 = sphi 0, %s105
      %s106 = sphi 0, %s103
      %s107 = sphi 0, %s106
      %s123 = sphi 0, %s107
      %s131 = sphi 0, %s133
      %s134 = sphi 0, %s131
      %s135 = sphi 0, %s134
      %s151 = sphi 0, %s135
      %s155 = sphi 0, %s155
      %s157 = sphi 0, %s155
      %s158 = sphi 0, %s157
      %s172 = sphi 0, %s158
      %s176 = sphi 0, %s176
      %s178 = sphi 0, %s176
      %s179 = sphi 0, %s178
      %s193 = sphi 0, %s179
      %s197 = sphi 0, %s197
      %s199 = sphi 0, %s197
      %s200 = sphi 0, %s199
      %s214 = sphi 0, %s200
      %s218 = sphi 0, %s218
      %s220 = sphi 0, %s218
      %s221 = sphi 0, %s220
      %s235 = sphi 0, %s221
      %s243 = sphi 0, %s245
      %s246 = sphi 0, %s243
      %s247 = sphi 0, %s246
      %s263 = sphi 0, %s247
    $region4: #{tpu_custom_call.1} parent=1 // loop_header_branch
      %30 = sbr.rel (%p28) target = $region8
    $region5: #{tpu_custom_call.1} parent=1 // loop_body
      %s32 = ssub.s32 %s27, 1
      %s33 = ssub.s32 %s27, 2
      %s40 = sadd.s32 1, %s35
      %p41 = scmp.ge.s32.totalorder %s40, 1
      %s42 = scalar_select %p41, 0, %s40
      %s43 = sadd.s32 1, %s34
      %s44 = scalar_select %p41, %s43, %s34
      %p45 = scmp.ge.s32.totalorder %s44, 2
      %s46 = scalar_select %p45, 0, %s44
      %s47 = ssub.s32 %s34, %s46
      %s48 = ssub.s32 %s35, %s42
      %s49 = sor.u32 %s47, %s48
      %p50 = scmp.eq.s32.totalorder %s49, 0
      %s52 = sadd.s32 %s51, 1
      %s53 = scalar_select %p50, %s51, %s52
      %p56 = pneg %p50
      %p57 = scmp.eq.s32.totalorder %s27, 1
      %p58 = por %p56, %p57
      %p59 = scmp.ne.s32.totalorder %s51, %s54
      %p60 = scmp.eq.s32.totalorder %s27, 0
      %p61 = por %p59, %p60
      %p62 = scmp.ne.s32.totalorder %s51, %s54
      %p63 = scmp.eq.s32.totalorder %s32, 1
      %p64 = por %p62, %p63
      %p65 = scmp.ne.s32.totalorder %s54, %s55
      %p66 = scmp.eq.s32.totalorder %s32, 0
      %p67 = por %p65, %p66
      %p68 = scmp.ne.s32.totalorder %s54, %s55
      %p69 = scmp.eq.s32.totalorder %s33, 1
      %p70 = por %p68, %p69
      %p72 = scmp.ne.s32.totalorder %s55, %s71
      %p73 = scmp.eq.s32.totalorder %s33, 0
      %p74 = por %p72, %p73
      %s75 = ssub.s32 %s34, %s46
      %p76 = scmp.eq.s32.totalorder %s75, 0
      %s78 = sadd.s32 %s77, 1
      %s79 = scalar_select %p76, %s77, %s78
      %p82 = pneg %p76
      %p83 = scmp.eq.s32.totalorder %s27, 1
      %p84 = por %p82, %p83
      %p85 = scmp.ne.s32.totalorder %s77, %s80
      %p86 = scmp.eq.s32.totalorder %s27, 0
      %p87 = por %p85, %p86
      %p88 = scmp.ne.s32.totalorder %s77, %s80
      %p89 = scmp.eq.s32.totalorder %s32, 1
      %p90 = por %p88, %p89
      %p91 = scmp.ne.s32.totalorder %s80, %s81
      %p92 = scmp.eq.s32.totalorder %s32, 0
      %p93 = por %p91, %p92
      %p94 = scmp.ne.s32.totalorder %s80, %s81
      %p95 = scmp.eq.s32.totalorder %s33, 1
      %p96 = por %p94, %p95
      %p98 = scmp.ne.s32.totalorder %s81, %s97
      %p99 = scmp.eq.s32.totalorder %s33, 0
      %p100 = por %p98, %p99
      %s101 = ssub.s32 %s34, %s46
      %p102 = scmp.eq.s32.totalorder %s101, 0
      %s104 = sadd.s32 %s103, 1
      %s105 = scalar_select %p102, %s103, %s104
      %p108 = pneg %p102
      %p109 = scmp.eq.s32.totalorder %s27, 1
      %p110 = por %p108, %p109
      %p111 = scmp.ne.s32.totalorder %s103, %s106
      %p112 = scmp.eq.s32.totalorder %s27, 0
      %p113 = por %p111, %p112
      %p114 = scmp.ne.s32.totalorder %s103, %s106
      %p115 = scmp.eq.s32.totalorder %s32, 1
      %p116 = por %p114, %p115
      %p117 = scmp.ne.s32.totalorder %s106, %s107
      %p118 = scmp.eq.s32.totalorder %s32, 0
      %p119 = por %p117, %p118
      %p120 = scmp.ne.s32.totalorder %s106, %s107
      %p121 = scmp.eq.s32.totalorder %s33, 1
      %p122 = por %p120, %p121
      %p124 = scmp.ne.s32.totalorder %s107, %s123
      %p125 = scmp.eq.s32.totalorder %s33, 0
      %p126 = por %p124, %p125
      %s127 = ssub.s32 %s34, %s46
      %s128 = ssub.s32 %s35, %s42
      %s129 = sor.u32 %s127, %s128
      %p130 = scmp.eq.s32.totalorder %s129, 0
      %s132 = sadd.s32 %s131, 1
      %s133 = scalar_select %p130, %s131, %s132
      %p136 = pneg %p130
      %p137 = scmp.eq.s32.totalorder %s27, 1
      %p138 = por %p136, %p137
      %p139 = scmp.ne.s32.totalorder %s131, %s134
      %p140 = scmp.eq.s32.totalorder %s27, 0
      %p141 = por %p139, %p140
      %p142 = scmp.ne.s32.totalorder %s131, %s134
      %p143 = scmp.eq.s32.totalorder %s32, 1
      %p144 = por %p142, %p143
      %p145 = scmp.ne.s32.totalorder %s134, %s135
      %p146 = scmp.eq.s32.totalorder %s32, 0
      %p147 = por %p145, %p146
      %p148 = scmp.ne.s32.totalorder %s134, %s135
      %p149 = scmp.eq.s32.totalorder %s33, 1
      %p150 = por %p148, %p149
      %p152 = scmp.ne.s32.totalorder %s135, %s151
      %p153 = scmp.eq.s32.totalorder %s33, 0
      %p154 = por %p152, %p153
      %s156 = sadd.s32 %s155, 1
      %p159 = scmp.eq.s32.totalorder %s27, 1
      %p160 = scmp.ne.s32.totalorder %s155, %s157
      %p161 = scmp.eq.s32.totalorder %s27, 0
      %p162 = por %p160, %p161
      %p163 = scmp.ne.s32.totalorder %s155, %s157
      %p164 = scmp.eq.s32.totalorder %s32, 1
      %p165 = por %p163, %p164
      %p166 = scmp.ne.s32.totalorder %s157, %s158
      %p167 = scmp.eq.s32.totalorder %s32, 0
      %p168 = por %p166, %p167
      %p169 = scmp.ne.s32.totalorder %s157, %s158
      %p170 = scmp.eq.s32.totalorder %s33, 1
      %p171 = por %p169, %p170
      %p173 = scmp.ne.s32.totalorder %s158, %s172
      %p174 = scmp.eq.s32.totalorder %s33, 0
      %p175 = por %p173, %p174
      %s177 = sadd.s32 %s176, 1
      %p180 = scmp.eq.s32.totalorder %s27, 1
      %p181 = scmp.ne.s32.totalorder %s176, %s178
      %p182 = scmp.eq.s32.totalorder %s27, 0
      %p183 = por %p181, %p182
      %p184 = scmp.ne.s32.totalorder %s176, %s178
      %p185 = scmp.eq.s32.totalorder %s32, 1
      %p186 = por %p184, %p185
      %p187 = scmp.ne.s32.totalorder %s178, %s179
      %p188 = scmp.eq.s32.totalorder %s32, 0
      %p189 = por %p187, %p188
      %p190 = scmp.ne.s32.totalorder %s178, %s179
      %p191 = scmp.eq.s32.totalorder %s33, 1
      %p192 = por %p190, %p191
      %p194 = scmp.ne.s32.totalorder %s179, %s193
      %p195 = scmp.eq.s32.totalorder %s33, 0
      %p196 = por %p194, %p195
      %s198 = sadd.s32 %s197, 1
      %p201 = scmp.eq.s32.totalorder %s27, 1
      %p202 = scmp.ne.s32.totalorder %s197, %s199
      %p203 = scmp.eq.s32.totalorder %s27, 0
      %p204 = por %p202, %p203
      %p205 = scmp.ne.s32.totalorder %s197, %s199
      %p206 = scmp.eq.s32.totalorder %s32, 1
      %p207 = por %p205, %p206
      %p208 = scmp.ne.s32.totalorder %s199, %s200
      %p209 = scmp.eq.s32.totalorder %s32, 0
      %p210 = por %p208, %p209
      %p211 = scmp.ne.s32.totalorder %s199, %s200
      %p212 = scmp.eq.s32.totalorder %s33, 1
      %p213 = por %p211, %p212
      %p215 = scmp.ne.s32.totalorder %s200, %s214
      %p216 = scmp.eq.s32.totalorder %s33, 0
      %p217 = por %p215, %p216
      %s219 = sadd.s32 %s218, 1
      %p222 = scmp.eq.s32.totalorder %s27, 1
      %p223 = scmp.ne.s32.totalorder %s218, %s220
      %p224 = scmp.eq.s32.totalorder %s27, 0
      %p225 = por %p223, %p224
      %p226 = scmp.ne.s32.totalorder %s218, %s220
      %p227 = scmp.eq.s32.totalorder %s32, 1
      %p228 = por %p226, %p227
      %p229 = scmp.ne.s32.totalorder %s220, %s221
      %p230 = scmp.eq.s32.totalorder %s32, 0
      %p231 = por %p229, %p230
      %p232 = scmp.ne.s32.totalorder %s220, %s221
      %p233 = scmp.eq.s32.totalorder %s33, 1
      %p234 = por %p232, %p233
      %p236 = scmp.ne.s32.totalorder %s221, %s235
      %p237 = scmp.eq.s32.totalorder %s33, 0
      %p238 = por %p236, %p237
      %s239 = ssub.s32 %s34, %s46
      %s240 = ssub.s32 %s35, %s42
      %s241 = sor.u32 %s239, %s240
      %p242 = scmp.eq.s32.totalorder %s241, 0
      %s244 = sadd.s32 %s243, 1
      %s245 = scalar_select %p242, %s243, %s244
      %p248 = pneg %p242
      %p249 = scmp.eq.s32.totalorder %s27, 1
      %p250 = por %p248, %p249
      %p251 = scmp.ne.s32.totalorder %s243, %s246
      %p252 = scmp.eq.s32.totalorder %s27, 0
      %p253 = por %p251, %p252
      %p254 = scmp.ne.s32.totalorder %s243, %s246
      %p255 = scmp.eq.s32.totalorder %s32, 1
      %p256 = por %p254, %p255
      %p257 = scmp.ne.s32.totalorder %s246, %s247
      %p258 = scmp.eq.s32.totalorder %s32, 0
      %p259 = por %p257, %p258
      %p260 = scmp.ne.s32.totalorder %s246, %s247
      %p261 = scmp.eq.s32.totalorder %s33, 1
      %p262 = por %p260, %p261
      %p264 = scmp.ne.s32.totalorder %s247, %s263
      %p265 = scmp.eq.s32.totalorder %s33, 0
      %p266 = por %p264, %p265
      %p267 = scmp.le.s32.totalorder 1, %s27
      %p268 = scmp.lt.s32.totalorder %s27, 3
      %p269 = pnand %p267, %p268
      %p270 = pneg %p269
      // Predicated region
      $region9: #{tpu_custom_call.1} parent=5 // pred_check
        _
      $region10: #{tpu_custom_call.1} parent=5 // pred_check_branch
        %272 = sbr.rel (%p269) target = $region12
      $region11: #{tpu_custom_call.1} parent=5 // pred_region
        %s273 = ssub.s32 %s27, 1
        // Predicated region
        $region13: #{tpu_custom_call.1} parent=11 // pred_check
          %p274 = pneg %p168
        $region14: #{tpu_custom_call.1} parent=11 // pred_check_branch
          %276 = sbr.rel (%p274) target = $region16
        $region15: #{tpu_custom_call.1} parent=11 // pred_region
          %278 = vsyncadd [#allocation10], 0
          %s279 = sshll.u32 %s4, 4
          %s280 = int_to_ptr.hbm [resolvable:$true] %s279
          %s281 = sshll.u32 [#allocation11], 4
          %s282 = int_to_ptr.vmem [resolvable:$true] %s281
          %287 = dma.hbm_to_vmem [thread:$0]  %s280, 256, %s282, [#allocation10], 64, 64, 4
        $region16: #{tpu_custom_call.1} parent=11 // pred_fallthru
          _
        // Predicated region
        $region17: #{tpu_custom_call.1} parent=11 // pred_check
          %p288 = pneg %p189
        $region18: #{tpu_custom_call.1} parent=11 // pred_check_branch
          %290 = sbr.rel (%p288) target = $region20
        $region19: #{tpu_custom_call.1} parent=11 // pred_region
          _
        $region20: #{tpu_custom_call.1} parent=11 // pred_fallthru
          _
        // Predicated region
        $region21: #{tpu_custom_call.1} parent=11 // pred_check
          %p291 = pneg %p210
        $region22: #{tpu_custom_call.1} parent=11 // pred_check_branch
          %293 = sbr.rel (%p291) target = $region24
        $region23: #{tpu_custom_call.1} parent=11 // pred_region
          %295 = vsyncadd [#allocation13], 0
          %s296 = sshll.u32 %s6, 4
          %s297 = int_to_ptr.hbm [resolvable:$true] %s296
          %s298 = sshll.u32 [#allocation12], 4
          %s299 = int_to_ptr.vmem [resolvable:$true] %s298
          %304 = dma.hbm_to_vmem [thread:$0]  %s297, 256, %s299, [#allocation13], 64, 64, 4
        $region24: #{tpu_custom_call.1} parent=11 // pred_fallthru
          _
        // Predicated region
        $region25: #{tpu_custom_call.1} parent=11 // pred_check
          %p305 = pneg %p231
        $region26: #{tpu_custom_call.1} parent=11 // pred_check_branch
          %307 = sbr.rel (%p305) target = $region28
        $region27: #{tpu_custom_call.1} parent=11 // pred_region
          _
        $region28: #{tpu_custom_call.1} parent=11 // pred_fallthru
          _
      $region12: #{tpu_custom_call.1} parent=5 // pred_fallthru
        _
      %p308 = scmp.lt.s32.totalorder %s27, 2
      // Predicated region
      $region29: #{tpu_custom_call.1} parent=5 // pred_check
        %p309 = pneg %p308
      $region30: #{tpu_custom_call.1} parent=5 // pred_check_branch
        %311 = sbr.rel (%p309) target = $region32
      $region31: #{tpu_custom_call.1} parent=5 // pred_region
        // Predicated region
        $region33: #{tpu_custom_call.1} parent=31 // pred_check
          %p312 = pneg %p61
        $region34: #{tpu_custom_call.1} parent=31 // pred_check_branch
          %314 = sbr.rel (%p312) target = $region36
        $region35: #{tpu_custom_call.1} parent=31 // pred_region
          %s315 = sand.u32 %s51, 1
          %s316 = scalar_lea.sflag [#allocation4], %s315
          %s317 = sand.u32 %s51, 1
          %s318 = smul.addr %s317, 4
          %s319 = scalar_lea.vmem [#allocation3], %s318
          %321 = vsyncadd %s316, 0
          %s322 = sadd.s32 %s35, %s34
          %s323 = smul.addr %s322, 4
          %s324 = scalar_lea.hbm %s0, %s323
          %s326 = sshll.u32 %s324, 4
          %s327 = int_to_ptr.hbm [resolvable:$true] %s326
          %s328 = sshll.u32 %s319, 4
          %s329 = int_to_ptr.vmem [resolvable:$true] %s328
          %331 = dma.hbm_to_vmem [thread:$0]  %s327, 64, %s329, %s316
        $region36: #{tpu_custom_call.1} parent=31 // pred_fallthru
          _
        // Predicated region
        $region37: #{tpu_custom_call.1} parent=31 // pred_check
          %p332 = pneg %p87
        $region38: #{tpu_custom_call.1} parent=31 // pred_check_branch
          %334 = sbr.rel (%p332) target = $region40
        $region39: #{tpu_custom_call.1} parent=31 // pred_region
          %s335 = sand.u32 %s27, 1
          %s336 = scalar_lea.sflag [#allocation7], %s335
          %s337 = sand.u32 %s77, 1
          %s338 = smul.addr %s337, 4
          %s339 = scalar_lea.vmem [#allocation6], %s338
          %341 = vsyncadd %s336, 0
          %s342 = smul.addr %s34, 4
          %s343 = scalar_lea.hbm %s1, %s342
          %s345 = sshll.u32 %s343, 4
          %s346 = int_to_ptr.hbm [resolvable:$true] %s345
          %s347 = sshll.u32 %s339, 4
          %s348 = int_to_ptr.vmem [resolvable:$true] %s347
          %350 = dma.hbm_to_vmem [thread:$0]  %s346, 64, %s348, %s336
        $region40: #{tpu_custom_call.1} parent=31 // pred_fallthru
          _
        // Predicated region
        $region41: #{tpu_custom_call.1} parent=31 // pred_check
          %p351 = pneg %p113
        $region42: #{tpu_custom_call.1} parent=31 // pred_check_branch
          %353 = sbr.rel (%p351) target = $region44
        $region43: #{tpu_custom_call.1} parent=31 // pred_region
          %s354 = sand.u32 %s27, 1
          %s355 = scalar_lea.sflag [#allocation7], %s354
          %s356 = sand.u32 %s103, 1
          %s357 = smul.addr %s356, 4
          %s358 = scalar_lea.vmem [#allocation8], %s357
          %360 = vsyncadd %s355, 0
          %s361 = smul.addr %s34, 4
          %s362 = scalar_lea.hbm %s2, %s361
          %s364 = sshll.u32 %s362, 4
          %s365 = int_to_ptr.hbm [resolvable:$true] %s364
          %s366 = sshll.u32 %s358, 4
          %s367 = int_to_ptr.vmem [resolvable:$true] %s366
          %369 = dma.hbm_to_vmem [thread:$0]  %s365, 64, %s367, %s355
        $region44: #{tpu_custom_call.1} parent=31 // pred_fallthru
          _
        // Predicated region
        $region45: #{tpu_custom_call.1} parent=31 // pred_check
          %p370 = pneg %p141
        $region46: #{tpu_custom_call.1} parent=31 // pred_check_branch
          %372 = sbr.rel (%p370) target = $region48
        $region47: #{tpu_custom_call.1} parent=31 // pred_region
          %s373 = sand.u32 %s27, 1
          %s374 = scalar_lea.sflag [#allocation10], %s373
          %s375 = sand.u32 %s131, 1
          %s376 = smul.addr %s375, 4
          %s377 = scalar_lea.vmem [#allocation9], %s376
          %379 = vsyncadd %s374, 0
          %s380 = sadd.s32 %s35, %s34
          %s381 = smul.addr %s380, 4
          %s382 = scalar_lea.hbm %s3, %s381
          %s384 = sshll.u32 %s382, 4
          %s385 = int_to_ptr.hbm [resolvable:$true] %s384
          %s386 = sshll.u32 %s377, 4
          %s387 = int_to_ptr.vmem [resolvable:$true] %s386
          %389 = dma.hbm_to_vmem [thread:$0]  %s385, 64, %s387, %s374
        $region48: #{tpu_custom_call.1} parent=31 // pred_fallthru
          _
      $region32: #{tpu_custom_call.1} parent=5 // pred_fallthru
        _
      %p390 = scmp.le.s32.totalorder 1, %s27
      %p391 = scmp.lt.s32.totalorder %s27, 3
      %p392 = pnand %p390, %p391
      %p393 = pneg %p392
      // Predicated region
      $region49: #{tpu_custom_call.1} parent=5 // pred_check
        _
      $region50: #{tpu_custom_call.1} parent=5 // pred_check_branch
        %395 = sbr.rel (%p392) target = $region52
      $region51: #{tpu_custom_call.1} parent=5 // pred_region
        %s396 = ssub.s32 %s27, 1
        %s397 = sand.u32 %s54, 1
        %s398 = scalar_lea.sflag [#allocation4], %s397
        %s399 = sand.u32 %s54, 1
        %s400 = smul.addr %s399, 4
        %s401 = scalar_lea.vmem [#allocation3], %s400
        // Predicated region
        $region53: #{tpu_custom_call.1} parent=51 // pred_check
          %p402 = pneg %p67
        $region54: #{tpu_custom_call.1} parent=51 // pred_check_branch
          %404 = sbr.rel (%p402) target = $region56
        $region55: #{tpu_custom_call.1} parent=51 // pred_region
          %406 = dma.done %s398, 64
        $region56: #{tpu_custom_call.1} parent=51 // pred_fallthru
          _
        %s407 = sand.u32 %s32, 1
        %s408 = scalar_lea.sflag [#allocation7], %s407
        %s409 = sand.u32 %s80, 1
        %s410 = smul.addr %s409, 4
        %s411 = scalar_lea.vmem [#allocation6], %s410
        // Predicated region
        $region57: #{tpu_custom_call.1} parent=51 // pred_check
          %p412 = pneg %p93
        $region58: #{tpu_custom_call.1} parent=51 // pred_check_branch
          %414 = sbr.rel (%p412) target = $region60
        $region59: #{tpu_custom_call.1} parent=51 // pred_region
          %416 = dma.done %s408, 64
        $region60: #{tpu_custom_call.1} parent=51 // pred_fallthru
          _
        %s417 = sand.u32 %s32, 1
        %s418 = scalar_lea.sflag [#allocation7], %s417
        %s419 = sand.u32 %s106, 1
        %s420 = smul.addr %s419, 4
        %s421 = scalar_lea.vmem [#allocation8], %s420
        // Predicated region
        $region61: #{tpu_custom_call.1} parent=51 // pred_check
          %p422 = pneg %p119
        $region62: #{tpu_custom_call.1} parent=51 // pred_check_branch
          %424 = sbr.rel (%p422) target = $region64
        $region63: #{tpu_custom_call.1} parent=51 // pred_region
          %426 = dma.done %s418, 64
        $region64: #{tpu_custom_call.1} parent=51 // pred_fallthru
          _
        %s427 = sand.u32 %s32, 1
        %s428 = scalar_lea.sflag [#allocation10], %s427
        %s429 = sand.u32 %s134, 1
        %s430 = smul.addr %s429, 4
        %s431 = scalar_lea.vmem [#allocation9], %s430
        // Predicated region
        $region65: #{tpu_custom_call.1} parent=51 // pred_check
          %p432 = pneg %p147
        $region66: #{tpu_custom_call.1} parent=51 // pred_check_branch
          %434 = sbr.rel (%p432) target = $region68
        $region67: #{tpu_custom_call.1} parent=51 // pred_region
          %436 = dma.done %s428, 64
        $region68: #{tpu_custom_call.1} parent=51 // pred_fallthru
          _
        // Predicated region
        $region69: #{tpu_custom_call.1} parent=51 // pred_check
          %p437 = pneg %p168
        $region70: #{tpu_custom_call.1} parent=51 // pred_check_branch
          %439 = sbr.rel (%p437) target = $region72
        $region71: #{tpu_custom_call.1} parent=51 // pred_region
          %441 = dma.done [#allocation10], 256
        $region72: #{tpu_custom_call.1} parent=51 // pred_fallthru
          _
        // Predicated region
        $region73: #{tpu_custom_call.1} parent=51 // pred_check
          %p442 = pneg %p210
        $region74: #{tpu_custom_call.1} parent=51 // pred_check_branch
          %444 = sbr.rel (%p442) target = $region76
        $region75: #{tpu_custom_call.1} parent=51 // pred_region
          %446 = dma.done [#allocation13], 256
        $region76: #{tpu_custom_call.1} parent=51 // pred_fallthru
          _
        %s447 = sand.u32 %s54, 1
        %s448 = scalar_lea.sflag [#allocation4], %s447
        %s449 = sand.u32 %s54, 1
        %s450 = smul.addr %s449, 4
        %s451 = scalar_lea.vmem [#allocation3], %s450
        %p452 = pneg %p67
        %p453 = pneg %p64
        %s454 = sand.u32 %s32, 1
        %s455 = scalar_lea.sflag [#allocation7], %s454
        %s456 = sand.u32 %s80, 1
        %s457 = smul.addr %s456, 4
        %s458 = scalar_lea.vmem [#allocation6], %s457
        %p459 = pneg %p93
        %p460 = pneg %p90
        %s461 = sand.u32 %s32, 1
        %s462 = scalar_lea.sflag [#allocation7], %s461
        %s463 = sand.u32 %s106, 1
        %s464 = smul.addr %s463, 4
        %s465 = scalar_lea.vmem [#allocation8], %s464
        %p466 = pneg %p119
        %p467 = pneg %p116
        %s468 = sand.u32 %s32, 1
        %s469 = scalar_lea.sflag [#allocation10], %s468
        %s470 = sand.u32 %s134, 1
        %s471 = smul.addr %s470, 4
        %s472 = scalar_lea.vmem [#allocation9], %s471
        %p473 = pneg %p147
        %p474 = pneg %p144
        %p475 = pneg %p168
        %p476 = pneg %p165
        %p477 = pneg %p189
        %p478 = pneg %p186
        %p479 = pneg %p210
        %p480 = pneg %p207
        %p481 = pneg %p231
        %p482 = pneg %p228
        %p483 = pneg %p259
        %p484 = pneg %p256
        %s485 = sand.u32 %s246, 1
        %s486 = scalar_lea.sflag [#allocation5], %s485
        %s487 = sand.u32 %s246, 1
        %s488 = smul.addr %s487, 8
        %s489 = scalar_lea.vmem [#allocation14], %s488
        %v491 = vld [vmem:[%s401] sm:$0xf]
        %v492 = vld [vmem:[%s411] sm:$0xf]
        %v493 = vld [vmem:[%s421] sm:$0xf]
        %v494 = vld [vmem:[%s431] sm:$0xf]
        %v495 = vunpack.c.l.bf16 %v494
        %v496 = vld [vmem:[#allocation11] sm:$0xf]
        %v497 = vld [vmem:[#allocation11 + $0x4] sm:$0xf]
        %v498 = vld [vmem:[#allocation11 + $0x8] sm:$0xf]
        %v499 = vld [vmem:[#allocation11 + $0xc] sm:$0xf]
        %v500 = vld [vmem:[%s5] sm:$0x1]
        %v502 = vperm.slane %v500, 0
        %v508 = vunpack.c.l.b16 %v496
        %v509 = vunpack.c.l.b16 %v497
        %v510 = vunpack.c.l.b16 %v498
        %v511 = vunpack.c.l.b16 %v499
        %v512 = vpack.c.b16 %v509, %v508
        %v513 = vpack.c.b16 %v511, %v510
        %vm516 = vcmask 261120
        %v518 = vsel %vm516, %v491, 0
        %520 = vmatpush.bf16.msra.mxu0 0
        %521 = vmatpush.bf16.msra.mxu0 0
        %522 = vmatpush.bf16.msra.mxu0 0
        %523 = vmatpush.bf16.msra.mxu0 0
        %524 = vmatpush.bf16.msra.mxu0 0
        %525 = vmatpush.bf16.msra.mxu0 0
        %526 = vmatpush.bf16.msra.mxu0 %v513
        %527 = vmatpush.bf16.msra.mxu0 %v512
        %528 = vmatmul.bf16.gmra.mxu0 %v518
        %v529 = vpop.f32.mrf.mxu0
        %v530 = vadd.f32 %v502, %v529
        %v531 = vpop.f32.mrf.mxu0
        %532 = vdwg.mxu0
        %v533 = vpack.c.bf16 %v530, %v530
        %vm534 = vcmask 64512
        %v536 = vsel %vm534, %v533, 0
        %v539 = vsel %vm534, %v492, 0
        %541 = vmatpush.bf16.xpose.msra.mxu0 0
        %542 = vmatpush.bf16.xpose.msra.mxu0 0
        %543 = vmatpush.bf16.xpose.msra.mxu0 0
        %544 = vmatpush.bf16.xpose.msra.mxu0 0
        %545 = vmatpush.bf16.xpose.msra.mxu0 0
        %546 = vmatpush.bf16.xpose.msra.mxu0 0
        %547 = vmatpush.bf16.xpose.msra.mxu0 0
        %548 = vmatpush.bf16.xpose.msra.mxu0 %v539
        %549 = vmatmul.bf16.gmra.mxu0 %v536
        %v550 = vpop.f32.mrf.mxu0
        %v551 = vadd.f32 %v495, %v550
        %v552 = vpop.f32.mrf.mxu0
        %553 = vdwg.mxu0
        %v554 = vsel %vm534, %v551, -inf
        %555 = vmax.xlane.f32.xlu0 %v554
        %v556 = vpop.xlane.xlu0 %555
        %v557 = vsub.f32 %v551, %v556
        %v558 = vmul.f32 %v557, 1.442695
        %v559 = vpow.pop %v558
        %v560 = vsel %vm534, %v559, 0.0
        %561 = vadd.xlane.f32.xlu0 %v560
        %v562 = vpop.xlane.xlu0 %561
        %v563 = vrcp.pop %v562
        %v564 = vmul.f32 %v562, %v563
        %v565 = vsub.f32 1.0, %v564
        %v566 = vmul.f32 %v563, %v565
        %v567 = vadd.f32 %v563, %v566
        %vm568 = vweird.f32 %v562
        %vm569 = vweird.f32 %v563
        %vm570 = vmor %vm568, %vm569
        %v571 = vsel %vm570, %v563, %v567
        %v572 = vand.u32 2147483647, %v562
        %vm573 = vcmp.eq.f32.partialorder %v572, 8.507059e+37
        %v574 = vand.u32 %v562, 2147483648
        %v575 = vor.u32 1.1754944e-38, %v574
        %v576 = vsel %vm573, %v575, %v571
        %v577 = vmul.f32 %v559, %v576
        %v578 = vpack.c.bf16 %v577, %v577
        %v580 = vsel %vm534, %v578, 0
        %vm582 = vcmask 1043456
        %v584 = vsel %vm582, %v493, 0
        %586 = vmatpush.bf16.msra.mxu0 0
        %587 = vmatpush.bf16.msra.mxu0 0
        %588 = vmatpush.bf16.msra.mxu0 0
        %589 = vmatpush.bf16.msra.mxu0 0
        %590 = vmatpush.bf16.msra.mxu0 0
        %591 = vmatpush.bf16.msra.mxu0 0
        %592 = vmatpush.bf16.msra.mxu0 0
        %593 = vmatpush.bf16.msra.mxu0 %v584
        %594 = vmatmul.bf16.gmra.mxu0 %v580
        %v595 = vpop.f32.mrf.mxu0
        %v596 = vadd.f32 0.0, %v595
        %v597 = vpop.f32.mrf.mxu0
        %598 = vdwg.mxu0
        %v599 = vpack.c.bf16 %v596, %v596
        %vm600 = vcmask 60416
        %601 = vst.msk [vmem:[#allocation2] sm:$0xf] %vm600, %v599
        %v603 = vunpack.c.l.b16 %v533
        %v604 = vpack.c.b16 %v603, %v603
        %605 = vrot.lane.b32.xlu0 %v604, 120
        %v606 = vpop.permute.xlu0 %605
        %v608 = vunpack.c.l.b16 %v492
        %v609 = vpack.c.b16 %v608, %v608
        %610 = vrot.lane.b32.xlu0 %v609, 120
        %v611 = vpop.permute.xlu0 %610
        %v613 = vsel %vm534, %v606, 0
        %v616 = vsel %vm534, %v611, 0
        %618 = vmatpush.bf16.xpose.msra.mxu0 0
        %619 = vmatpush.bf16.xpose.msra.mxu0 0
        %620 = vmatpush.bf16.xpose.msra.mxu0 0
        %621 = vmatpush.bf16.xpose.msra.mxu0 0
        %622 = vmatpush.bf16.xpose.msra.mxu0 0
        %623 = vmatpush.bf16.xpose.msra.mxu0 0
        %624 = vmatpush.bf16.xpose.msra.mxu0 0
        %625 = vmatpush.bf16.xpose.msra.mxu0 %v616
        %626 = vmatmul.bf16.gmra.mxu0 %v613
        %v627 = vpop.f32.mrf.mxu0
        %v628 = vadd.f32 %v495, %v627
        %v629 = vpop.f32.mrf.mxu0
        %630 = vdwg.mxu0
        %v631 = vsel %vm534, %v628, -inf
        %632 = vmax.xlane.f32.xlu0 %v631
        %v633 = vpop.xlane.xlu0 %632
        %v634 = vsub.f32 %v628, %v633
        %v635 = vmul.f32 %v634, 1.442695
        %v636 = vpow.pop %v635
        %v637 = vsel %vm534, %v636, 0.0
        %638 = vadd.xlane.f32.xlu0 %v637
        %v639 = vpop.xlane.xlu0 %638
        %v640 = vrcp.pop %v639
        %v641 = vmul.f32 %v639, %v640
        %v642 = vsub.f32 1.0, %v641
        %v643 = vmul.f32 %v640, %v642
        %v644 = vadd.f32 %v640, %v643
        %vm645 = vweird.f32 %v639
        %vm646 = vweird.f32 %v640
        %vm647 = vmor %vm645, %vm646
        %v648 = vsel %vm647, %v640, %v644
        %v649 = vand.u32 2147483647, %v639
        %vm650 = vcmp.eq.f32.partialorder %v649, 8.507059e+37
        %v651 = vand.u32 %v639, 2147483648
        %v652 = vor.u32 1.1754944e-38, %v651
        %v653 = vsel %vm650, %v652, %v648
        %v654 = vmul.f32 %v636, %v653
        %v655 = vpack.c.bf16 %v654, %v654
        %v657 = vunpack.c.l.b16 %v493
        %v658 = vpack.c.b16 %v657, %v657
        %659 = vrot.lane.b32.xlu0 %v658, 120
        %v660 = vpop.permute.xlu0 %659
        %v662 = vsel %vm534, %v655, 0
        %v665 = vsel %vm582, %v660, 0
        %667 = vmatpush.bf16.msra.mxu0 0
        %668 = vmatpush.bf16.msra.mxu0 0
        %669 = vmatpush.bf16.msra.mxu0 0
        %670 = vmatpush.bf16.msra.mxu0 0
        %671 = vmatpush.bf16.msra.mxu0 0
        %672 = vmatpush.bf16.msra.mxu0 0
        %673 = vmatpush.bf16.msra.mxu0 0
        %674 = vmatpush.bf16.msra.mxu0 %v665
        %675 = vmatmul.bf16.gmra.mxu0 %v662
        %v676 = vpop.f32.mrf.mxu0
        %v677 = vadd.f32 0.0, %v676
        %v678 = vpop.f32.mrf.mxu0
        %679 = vdwg.mxu0
        %v680 = vpack.c.bf16 %v677, %v677
        %682 = vrot.lane.b32.xlu0 %v680, 8
        %v683 = vpop.permute.xlu0 %682
        %vm685 = vcmask 126016
        %686 = vst.msk [vmem:[#allocation2] sm:$0xf] %vm685, %v683
        %687 = vrot.lane.b32.xlu0 %v604, 112
        %v688 = vpop.permute.xlu0 %687
        %689 = vrot.lane.b32.xlu0 %v609, 112
        %v690 = vpop.permute.xlu0 %689
        %v692 = vsel %vm534, %v688, 0
        %v695 = vsel %vm534, %v690, 0
        %697 = vmatpush.bf16.xpose.msra.mxu0 0
        %698 = vmatpush.bf16.xpose.msra.mxu0 0
        %699 = vmatpush.bf16.xpose.msra.mxu0 0
        %700 = vmatpush.bf16.xpose.msra.mxu0 0
        %701 = vmatpush.bf16.xpose.msra.mxu0 0
        %702 = vmatpush.bf16.xpose.msra.mxu0 0
        %703 = vmatpush.bf16.xpose.msra.mxu0 0
        %704 = vmatpush.bf16.xpose.msra.mxu0 %v695
        %705 = vmatmul.bf16.gmra.mxu0 %v692
        %v706 = vpop.f32.mrf.mxu0
        %v707 = vadd.f32 %v495, %v706
        %v708 = vpop.f32.mrf.mxu0
        %709 = vdwg.mxu0
        %v710 = vsel %vm534, %v707, -inf
        %711 = vmax.xlane.f32.xlu0 %v710
        %v712 = vpop.xlane.xlu0 %711
        %v713 = vsub.f32 %v707, %v712
        %v714 = vmul.f32 %v713, 1.442695
        %v715 = vpow.pop %v714
        %v716 = vsel %vm534, %v715, 0.0
        %717 = vadd.xlane.f32.xlu0 %v716
        %v718 = vpop.xlane.xlu0 %717
        %v719 = vrcp.pop %v718
        %v720 = vmul.f32 %v718, %v719
        %v721 = vsub.f32 1.0, %v720
        %v722 = vmul.f32 %v719, %v721
        %v723 = vadd.f32 %v719, %v722
        %vm724 = vweird.f32 %v718
        %vm725 = vweird.f32 %v719
        %vm726 = vmor %vm724, %vm725
        %v727 = vsel %vm726, %v719, %v723
        %v728 = vand.u32 2147483647, %v718
        %vm729 = vcmp.eq.f32.partialorder %v728, 8.507059e+37
        %v730 = vand.u32 %v718, 2147483648
        %v731 = vor.u32 1.1754944e-38, %v730
        %v732 = vsel %vm729, %v731, %v727
        %v733 = vmul.f32 %v715, %v732
        %v734 = vpack.c.bf16 %v733, %v733
        %735 = vrot.lane.b32.xlu0 %v658, 112
        %v736 = vpop.permute.xlu0 %735
        %v738 = vsel %vm534, %v734, 0
        %v741 = vsel %vm582, %v736, 0
        %743 = vmatpush.bf16.msra.mxu0 0
        %744 = vmatpush.bf16.msra.mxu0 0
        %745 = vmatpush.bf16.msra.mxu0 0
        %746 = vmatpush.bf16.msra.mxu0 0
        %747 = vmatpush.bf16.msra.mxu0 0
        %748 = vmatpush.bf16.msra.mxu0 0
        %749 = vmatpush.bf16.msra.mxu0 0
        %750 = vmatpush.bf16.msra.mxu0 %v741
        %751 = vmatmul.bf16.gmra.mxu0 %v738
        %v752 = vpop.f32.mrf.mxu0
        %v753 = vadd.f32 0.0, %v752
        %v754 = vpop.f32.mrf.mxu0
        %755 = vdwg.mxu0
        %v756 = vpack.c.bf16 %v753, %v753
        %758 = vrot.lane.b32.xlu0 %v756, 16
        %v759 = vpop.permute.xlu0 %758
        %vm761 = vcmask 191616
        %762 = vst.msk [vmem:[#allocation2] sm:$0xf] %vm761, %v759
        %763 = vrot.lane.b32.xlu0 %v604, 104
        %v764 = vpop.permute.xlu0 %763
        %765 = vrot.lane.b32.xlu0 %v609, 104
        %v766 = vpop.permute.xlu0 %765
        %v768 = vsel %vm534, %v764, 0
        %v771 = vsel %vm534, %v766, 0
        %773 = vmatpush.bf16.xpose.msra.mxu0 0
        %774 = vmatpush.bf16.xpose.msra.mxu0 0
        %775 = vmatpush.bf16.xpose.msra.mxu0 0
        %776 = vmatpush.bf16.xpose.msra.mxu0 0
        %777 = vmatpush.bf16.xpose.msra.mxu0 0
        %778 = vmatpush.bf16.xpose.msra.mxu0 0
        %779 = vmatpush.bf16.xpose.msra.mxu0 0
        %780 = vmatpush.bf16.xpose.msra.mxu0 %v771
        %781 = vmatmul.bf16.gmra.mxu0 %v768
        %v782 = vpop.f32.mrf.mxu0
        %v783 = vadd.f32 %v495, %v782
        %v784 = vpop.f32.mrf.mxu0
        %785 = vdwg.mxu0
        %v786 = vsel %vm534, %v783, -inf
        %787 = vmax.xlane.f32.xlu0 %v786
        %v788 = vpop.xlane.xlu0 %787
        %v789 = vsub.f32 %v783, %v788
        %v790 = vmul.f32 %v789, 1.442695
        %v791 = vpow.pop %v790
        %v792 = vsel %vm534, %v791, 0.0
        %793 = vadd.xlane.f32.xlu0 %v792
        %v794 = vpop.xlane.xlu0 %793
        %v795 = vrcp.pop %v794
        %v796 = vmul.f32 %v794, %v795
        %v797 = vsub.f32 1.0, %v796
        %v798 = vmul.f32 %v795, %v797
        %v799 = vadd.f32 %v795, %v798
        %vm800 = vweird.f32 %v794
        %vm801 = vweird.f32 %v795
        %vm802 = vmor %vm800, %vm801
        %v803 = vsel %vm802, %v795, %v799
        %v804 = vand.u32 2147483647, %v794
        %vm805 = vcmp.eq.f32.partialorder %v804, 8.507059e+37
        %v806 = vand.u32 %v794, 2147483648
        %v807 = vor.u32 1.1754944e-38, %v806
        %v808 = vsel %vm805, %v807, %v803
        %v809 = vmul.f32 %v791, %v808
        %v810 = vpack.c.bf16 %v809, %v809
        %811 = vrot.lane.b32.xlu0 %v658, 104
        %v812 = vpop.permute.xlu0 %811
        %v814 = vsel %vm534, %v810, 0
        %v817 = vsel %vm582, %v812, 0
        %819 = vmatpush.bf16.msra.mxu0 0
        %820 = vmatpush.bf16.msra.mxu0 0
        %821 = vmatpush.bf16.msra.mxu0 0
        %822 = vmatpush.bf16.msra.mxu0 0
        %823 = vmatpush.bf16.msra.mxu0 0
        %824 = vmatpush.bf16.msra.mxu0 0
        %825 = vmatpush.bf16.msra.mxu0 0
        %826 = vmatpush.bf16.msra.mxu0 %v817
        %827 = vmatmul.bf16.gmra.mxu0 %v814
        %v828 = vpop.f32.mrf.mxu0
        %v829 = vadd.f32 0.0, %v828
        %v830 = vpop.f32.mrf.mxu0
        %831 = vdwg.mxu0
        %v832 = vpack.c.bf16 %v829, %v829
        %834 = vrot.lane.b32.xlu0 %v832, 24
        %v835 = vpop.permute.xlu0 %834
        %vm837 = vcmask 257216
        %838 = vst.msk [vmem:[#allocation2] sm:$0xf] %vm837, %v835
        %v839 = vld [vmem:[#allocation2] sm:$0xf]
        %v840 = vld [vmem:[#allocation12] sm:$0xf]
        %v841 = vld [vmem:[#allocation12 + $0x4] sm:$0xf]
        %v842 = vld [vmem:[#allocation12 + $0x8] sm:$0xf]
        %v843 = vld [vmem:[#allocation12 + $0xc] sm:$0xf]
        %v844 = vld [vmem:[%s7] sm:$0x1]
        %v846 = vperm.slane %v844, 0
        %v852 = vunpack.c.l.b16 %v840
        %v853 = vunpack.c.l.b16 %v841
        %v854 = vunpack.c.l.b16 %v842
        %v855 = vunpack.c.l.b16 %v843
        %v856 = vpack.c.b16 %v853, %v852
        %v857 = vpack.c.b16 %v855, %v854
        %v861 = vsel %vm516, %v839, 0
        %863 = vmatpush.bf16.msra.mxu0 0
        %864 = vmatpush.bf16.msra.mxu0 0
        %865 = vmatpush.bf16.msra.mxu0 0
        %866 = vmatpush.bf16.msra.mxu0 0
        %867 = vmatpush.bf16.msra.mxu0 0
        %868 = vmatpush.bf16.msra.mxu0 0
        %869 = vmatpush.bf16.msra.mxu0 %v857
        %870 = vmatpush.bf16.msra.mxu0 %v856
        %871 = vmatmul.bf16.gmra.mxu0 %v861
        %v872 = vpop.f32.mrf.mxu0
        %v873 = vadd.f32 %v846, %v872
        %v874 = vpop.f32.mrf.mxu0
        %875 = vdwg.mxu0
        %876 = vst.msk [vmem:[%s489] sm:$0xff] %vm516, %v873
        %s877 = sand.u32 %s246, 1
        %s878 = scalar_lea.sflag [#allocation5], %s877
        %s879 = sand.u32 %s246, 1
        %s880 = smul.addr %s879, 8
        %s881 = scalar_lea.vmem [#allocation14], %s880
        // Predicated region
        $region77: #{tpu_custom_call.1} parent=51 // pred_check
          %p882 = pneg %p256
        $region78: #{tpu_custom_call.1} parent=51 // pred_check_branch
          %884 = sbr.rel (%p882) target = $region80
        $region79: #{tpu_custom_call.1} parent=51 // pred_region
          %886 = vsyncadd %s878, 0
          %s887 = sadd.s32 %s37, %s36
          %s888 = smul.addr %s887, 8
          %s889 = scalar_lea.hbm %s8, %s888
          %s891 = sshll.u32 %s881, 4
          %s892 = int_to_ptr.vmem [resolvable:$true] %s891
          %s893 = sshll.u32 %s889, 4
          %s894 = int_to_ptr.hbm [resolvable:$true] %s893
          %896 = dma.vmem_to_hbm [thread:$0]  %s892, 128, %s894, %s878
        $region80: #{tpu_custom_call.1} parent=51 // pred_fallthru
          _
      $region52: #{tpu_custom_call.1} parent=5 // pred_fallthru
        _
      %p897 = scmp.le.s32.totalorder 2, %s27
      // Predicated region
      $region81: #{tpu_custom_call.1} parent=5 // pred_check
        %p898 = pneg %p897
      $region82: #{tpu_custom_call.1} parent=5 // pred_check_branch
        %900 = sbr.rel (%p898) target = $region84
      $region83: #{tpu_custom_call.1} parent=5 // pred_region
        %s901 = ssub.s32 %s27, 2
        // Predicated region
        $region85: #{tpu_custom_call.1} parent=83 // pred_check
          %p902 = pneg %p262
        $region86: #{tpu_custom_call.1} parent=83 // pred_check_branch
          %904 = sbr.rel (%p902) target = $region88
        $region87: #{tpu_custom_call.1} parent=83 // pred_region
          %s905 = sand.u32 %s247, 1
          %s906 = scalar_lea.sflag [#allocation5], %s905
          %s907 = sand.u32 %s247, 1
          %s908 = smul.addr %s907, 8
          %s909 = scalar_lea.vmem [#allocation14], %s908
          %911 = dma.done %s906, 128
        $region88: #{tpu_custom_call.1} parent=83 // pred_fallthru
          _
      $region84: #{tpu_custom_call.1} parent=5 // pred_fallthru
        _
    $region6: #{tpu_custom_call.1} parent=1 // loop_footer
      %s31 = sadd.s32 1, %s27
    $region7: #{tpu_custom_call.1} parent=1 // loop_footer_branch
      %26 = sbr.rel target = $region3
    $region8: #{tpu_custom_call.1} parent=1 // loop_exit
      _
    %912 = vsyncpa [#allocation4], 1
    %s913 = scalar_lea.sflag [#allocation4], 1
    %914 = vsyncpa %s913, 1
    %915 = vsyncpa [#allocation7], 1
    %s916 = scalar_lea.sflag [#allocation7], 1
    %917 = vsyncpa %s916, 1
    %918 = vsyncpa [#allocation10], 1
    %s919 = scalar_lea.sflag [#allocation10], 1
    %920 = vsyncpa %s919, 1
    %921 = vsyncpa [#allocation13], 1
    %922 = vsyncpa [#allocation5], 1
    %s923 = scalar_lea.sflag [#allocation5], 1
    %924 = vsyncpa %s923, 1

</llo_original>
